<compile_context>
chip_gen: v5e
topology: v5e:2x2
jax: 0.10.0
libtpu: 0.0.40
codegen_flags: <defaults>
</compile_context>

<pallas_src>
import functools

import jax
import jax.numpy as jnp
from jax.experimental import pallas as pl
from jax.experimental.pallas import tpu as pltpu


# ---------------------------------------------------------------------------
# Generation-aware VMEM budgets.
# ---------------------------------------------------------------------------
def _budgets():
    cap = None
    try:
        cap = int(pltpu.get_tpu_info().vmem_capacity_bytes)
    except Exception:
        cap = None
    if not cap or cap <= 0:
        cap = 64 << 20  # conservative default (v7x-sized VMEM)
    if cap >= (96 << 20):      # v5e / v6e: 128 MiB physical VMEM
        return {"vmem_limit": 64 << 20, "stream_budget": 48 << 20,
                "fused_budget": 56 << 20}
    # v7x: 64 MiB physical VMEM -> smaller scoped limit and tile budgets.
    return {"vmem_limit": 32 << 20, "stream_budget": 20 << 20,
            "fused_budget": 26 << 20}


def _choose_spatial_tile(C, HW, itemsize, budget_bytes, n_live, max_lanes=4096):
    """Pick a lane-dense (multiple of 128) spatial tile.

    Returns (tile, needs_mask).  `n_live` = number of simultaneously live
    (C, tile) buffers (2 for an input-only pass, 4 for in+out double buffered).
    """
    per_lane = max(1, n_live) * C * itemsize
    max_t = budget_bytes // per_lane
    max_t = max(128, (max_t // 128) * 128)
    max_t = min(max_t, max_lanes)                     # keep unroll/VMEM sane
    hw_pad = pl.cdiv(HW, 128) * 128
    max_t = min(max_t, hw_pad)
    if HW % 128 == 0:
        # Prefer an exact divisor (no tail mask) if a reasonably big one exists.
        t = min(max_t, HW)
        while t >= 128 and 2 * t > max_t:
            if HW % t == 0:
                return t, False
            t -= 128
    return max_t, (HW % max_t) != 0


# ---------------------------------------------------------------------------
# Squeeze-excite gate, written with broadcasts + tiny reductions only
# (no in-kernel transposes / small matmuls needed).
#   y:   (C, 1)  f32 per-channel descriptor (std + mean)
#   w1t: (C, Cr) = W1.T    b1r: (1, Cr)
#   w2 : (C, Cr)           b2 : (C, 1)
# ---------------------------------------------------------------------------
def _se_gate(y, w1t, b1r, w2, b2):
    h = jnp.maximum(jnp.sum(w1t * y, axis=0, keepdims=True) + b1r, 0.0)  # (1, Cr)
    z = jnp.sum(w2 * h, axis=1, keepdims=True) + b2                      # (C, 1)
    return jax.nn.sigmoid(z)                                             # (C, 1) f32


# ---------------------------------------------------------------------------
# Fused single-pass kernel: stats + SE gate + multiply on a VMEM-resident slab.
# ---------------------------------------------------------------------------
def _fused_kernel(x_ref, w1t_ref, b1r_ref, w2_ref, b2_ref, o_ref, *, inv_hw):
    x = x_ref[0].astype(jnp.float32)                        # (C, HW)
    mean = jnp.sum(x, axis=1, keepdims=True) * inv_hw       # (C, 1)
    d = x - mean
    var = jnp.sum(d * d, axis=1, keepdims=True) * inv_hw
    y = jnp.sqrt(var) + mean                                 # std + mean
    s = _se_gate(y, w1t_ref[...], b1r_ref[...], w2_ref[...], b2_ref[...])
    o_ref[0] = (x * s).astype(o_ref.dtype)


# ---------------------------------------------------------------------------
# Pass 1: streaming stats (deferred lane reduce, pivot-shifted) + SE epilogue.
# ---------------------------------------------------------------------------
def _stats_se_kernel(x_ref, w1t_ref, b1r_ref, w2_ref, b2_ref, s_ref,
                     sum_ref, sumsq_ref, pivot_ref,
                     *, inv_hw, hw, t_hw, needs_mask):
    t = pl.program_id(1)
    C = sum_ref.shape[0]
    n_chunks = t_hw // 128

    @pl.when(t == 0)
    def _():
        sum_ref[...] = jnp.zeros_like(sum_ref)
        sumsq_ref[...] = jnp.zeros_like(sumsq_ref)
        # Per-channel pivot (first spatial element) to avoid catastrophic
        # cancellation in the one-pass variance when |mean| >> std.
        pivot_ref[...] = x_ref[0, :, pl.ds(0, 1)].astype(jnp.float32)

    pivot = pivot_ref[...]                                   # (C, 1)
    if needs_mask:
        lane = jax.lax.broadcasted_iota(jnp.int32, (C, 128), 1)
        base = t * t_hw

    # Accumulate 128-lane chunks with plain VPU adds; the single cross-lane
    # reduce happens only in the final epilogue (keeps the pass off the XLU).
    for k in range(n_chunks):
        xc = x_ref[0, :, pl.ds(k * 128, 128)].astype(jnp.float32)  # (C, 128)
        d = xc - pivot
        if needs_mask:
            m = (base + k * 128 + lane) < hw
            d = jnp.where(m, d, 0.0)
        sum_ref[...] += d
        sumsq_ref[...] += d * d

    @pl.when(t == pl.num_programs(1) - 1)
    def _():
        tot = jnp.sum(sum_ref[...], axis=1, keepdims=True)          # (C, 1)
        totq = jnp.sum(sumsq_ref[...], axis=1, keepdims=True)       # (C, 1)
        m_shift = tot * inv_hw
        mean = m_shift + pivot_ref[...]
        var = jnp.maximum(totq * inv_hw - m_shift * m_shift, 0.0)
        y = jnp.sqrt(var) + mean                                     # std + mean
        s_ref[0] = _se_gate(y, w1t_ref[...], b1r_ref[...],
                            w2_ref[...], b2_ref[...])


# ---------------------------------------------------------------------------
# Pass 2: out = x * s  (f32 gate broadcast over the spatial lanes).
# ---------------------------------------------------------------------------
def _gate_kernel(s_ref, x_ref, o_ref):
    o_ref[0] = (x_ref[0].astype(jnp.float32) * s_ref[0]).astype(o_ref.dtype)


# ---------------------------------------------------------------------------
# Wrappers.
# ---------------------------------------------------------------------------
def _run_fused(x, w1t, b1r, w2, b2, HW, budgets):
    B, C, _ = x.shape
    return pl.pallas_call(
        functools.partial(_fused_kernel, inv_hw=1.0 / HW),
        out_shape=jax.ShapeDtypeStruct((B, C, HW), x.dtype),
        grid_spec=pltpu.PrefetchScalarGridSpec(
            num_scalar_prefetch=0,
            grid=(B,),
            in_specs=[pl.BlockSpec((1, C, HW), lambda b: (b, 0, 0)),
                      pl.BlockSpec(w1t.shape, lambda b: (0, 0)),
                      pl.BlockSpec(b1r.shape, lambda b: (0, 0)),
                      pl.BlockSpec(w2.shape, lambda b: (0, 0)),
                      pl.BlockSpec(b2.shape, lambda b: (0, 0))],
            out_specs=pl.BlockSpec((1, C, HW), lambda b: (b, 0, 0)),
        ),
        compiler_params=pltpu.CompilerParams(
            dimension_semantics=("parallel",),
            vmem_limit_bytes=budgets["vmem_limit"]),
    )(x, w1t, b1r, w2, b2)


def _run_two_pass(x, w1t, b1r, w2, b2, HW, budgets):
    B, C, _ = x.shape
    itemsize = x.dtype.itemsize

    # ---- Pass 1: stats + SE gate.  Only x is streamed (2 live buffers). ----
    t1, mask1 = _choose_spatial_tile(C, HW, itemsize,
                                     budgets["stream_budget"], n_live=2)
    n_t1 = pl.cdiv(HW, t1)
    s = pl.pallas_call(
        functools.partial(_stats_se_kernel, inv_hw=1.0 / HW, hw=HW,
                          t_hw=t1, needs_mask=mask1),
        out_shape=jax.ShapeDtypeStruct((B, C, 1), jnp.float32),
        grid_spec=pltpu.PrefetchScalarGridSpec(
            num_scalar_prefetch=0,
            grid=(B, n_t1),
            in_specs=[pl.BlockSpec((1, C, t1), lambda b, t: (b, 0, t)),
                      pl.BlockSpec(w1t.shape, lambda b, t: (0, 0)),
                      pl.BlockSpec(b1r.shape, lambda b, t: (0, 0)),
                      pl.BlockSpec(w2.shape, lambda b, t: (0, 0)),
                      pl.BlockSpec(b2.shape, lambda b, t: (0, 0))],
            out_specs=pl.BlockSpec((1, C, 1), lambda b, t: (b, 0, 0)),
            scratch_shapes=[pltpu.VMEM((C, 128), jnp.float32),
                            pltpu.VMEM((C, 128), jnp.float32),
                            pltpu.VMEM((C, 1), jnp.float32)],
        ),
        compiler_params=pltpu.CompilerParams(
            dimension_semantics=("parallel", "arbitrary"),
            vmem_limit_bytes=budgets["vmem_limit"]),
    )(x, w1t, b1r, w2, b2)

    # ---- Pass 2: gate.  x in + out streamed (4 live buffers). ----
    t2, _ = _choose_spatial_tile(C, HW, itemsize,
                                 budgets["stream_budget"], n_live=4)
    n_t2 = pl.cdiv(HW, t2)
    out = pl.pallas_call(
        _gate_kernel,
        out_shape=jax.ShapeDtypeStruct((B, C, HW), x.dtype),
        grid_spec=pltpu.PrefetchScalarGridSpec(
            num_scalar_prefetch=0,
            grid=(B, n_t2),
            in_specs=[pl.BlockSpec((1, C, 1), lambda b, t: (b, 0, 0)),
                      pl.BlockSpec((1, C, t2), lambda b, t: (b, 0, t))],
            out_specs=pl.BlockSpec((1, C, t2), lambda b, t: (b, 0, t)),
        ),
        compiler_params=pltpu.CompilerParams(
            dimension_semantics=("parallel", "parallel"),
            vmem_limit_bytes=budgets["vmem_limit"]),
    )(s, x)
    return out


def contrast_channel_attention(x_nchw, w1, b1, w2, b2, force_two_pass=False):
    """x_nchw: (B, C, H, W).  w1: (Cr, C), b1: (Cr, 1) (or (Cr,)),
    w2: (C, Cr), b2: (C, 1) (or (C,)) — the squeezed 1x1-conv parameters."""
    B, C, H, W = x_nchw.shape
    HW = H * W
    x = x_nchw.reshape(B, C, HW)
    budgets = _budgets()

    # Pre-arrange the tiny SE parameters so the in-kernel epilogue needs only
    # broadcasts + reductions (no in-kernel transposes).
    w1t = jnp.asarray(w1, jnp.float32).T               # (C, Cr)
    b1r = jnp.asarray(b1, jnp.float32).reshape(1, -1)  # (1, Cr)
    w2f = jnp.asarray(w2, jnp.float32)                 # (C, Cr)
    b2f = jnp.asarray(b2, jnp.float32).reshape(-1, 1)  # (C, 1)

    # Fused single-pass path if one batch slab (2x in + 2x out, double buffered,
    # plus ~3 f32 temporaries) fits the generation-aware budget.
    slab_bytes = C * HW * x.dtype.itemsize
    fused_bytes = 4 * slab_bytes + 3 * C * HW * 4
    if (not force_two_pass) and fused_bytes <= budgets["fused_budget"]:
        out = _run_fused(x, w1t, b1r, w2f, b2f, HW, budgets)
    else:
        out = _run_two_pass(x, w1t, b1r, w2f, b2f, HW, budgets)
    return out.reshape(B, C, H, W)


# ---------------------------------------------------------------------------
# Pure-JAX reference mirroring the PyTorch forward.
# ---------------------------------------------------------------------------
def _reference(x, w1, b1, w2, b2):
    mean = jnp.mean(x, axis=(2, 3), keepdims=True)
    var = jnp.mean((x - mean) ** 2, axis=(2, 3), keepdims=True)
    y = jnp.sqrt(var) + mean                       # (B, C, 1, 1)
    yv = y[..., 0, 0]                              # (B, C)
    h = jnp.maximum(yv @ w1.T + b1[:, 0], 0.0)     # (B, Cr)
    s = jax.nn.sigmoid(h @ w2.T + b2[:, 0])        # (B, C)
    return x * s[:, :, None, None]


if __name__ == "__main__":
    B, C, H, W = 2, 4, 16, 16
    reduction = 2
    Cr = C // reduction

    key = jax.random.PRNGKey(0)
    kx, k1, k2, k3, k4 = jax.random.split(key, 5)

    x = jax.random.normal(kx, (B, C, H, W), dtype=jnp.float32)
    # Deterministic synthetic parameters (1x1 Conv2d weights squeezed to 2D).
    w1 = jax.random.normal(k1, (Cr, C), dtype=jnp.float32) * 0.5
    b1 = jax.random.normal(k2, (Cr, 1), dtype=jnp.float32) * 0.1
    w2 = jax.random.normal(k3, (C, Cr), dtype=jnp.float32) * 0.5
    b2 = jax.random.normal(k4, (C, 1), dtype=jnp.float32) * 0.1

    ref = _reference(x, w1, b1, w2, b2)

    # Fused single-pass path (selected automatically at this size).
    out = contrast_channel_attention(x, w1, b1, w2, b2)
    out = jax.block_until_ready(out)
    assert jnp.allclose(out, ref, atol=1e-5, rtol=1e-5), "fused path mismatch"

    # Streaming two-pass path (forced, to exercise the large-shape code path).
    out2 = contrast_channel_attention(x, w1, b1, w2, b2, force_two_pass=True)
    out2 = jax.block_until_ready(out2)
    assert jnp.allclose(out2, ref, atol=1e-5, rtol=1e-5), "two-pass mismatch"

    print("KERNEL_OK")
</pallas_src>

<mosaic_0001>
module attributes {stable_mosaic.version = 11 : i64} {
  func.func @_fused_kernel(%arg0: i32, %arg1: memref<1x4x256xf32, #tpu.memory_space<vmem>>, %arg2: memref<4x2xf32, #tpu.memory_space<vmem>>, %arg3: memref<1x2xf32, #tpu.memory_space<vmem>>, %arg4: memref<4x2xf32, #tpu.memory_space<vmem>>, %arg5: memref<4x1xf32, #tpu.memory_space<vmem>>, %arg6: memref<1x4x256xf32, #tpu.memory_space<vmem>>) attributes {dimension_semantics = [#tpu.dimension_semantics<parallel>], iteration_bounds = array<i64: 2>, scalar_prefetch = 0 : i64, scratch_operands = 0 : i64, tpu.core_type = #tpu.core_type<tc>, window_params = [{transform_indices = @transform_0, window_bounds = array<i64: 1, 4, 256>}, {pipeline_mode = #tpu.pipeline_mode<synchronous>, transform_indices = @transform_1, window_bounds = array<i64: 4, 2>}, {pipeline_mode = #tpu.pipeline_mode<synchronous>, transform_indices = @transform_2, window_bounds = array<i64: 1, 2>}, {pipeline_mode = #tpu.pipeline_mode<synchronous>, transform_indices = @transform_3, window_bounds = array<i64: 4, 2>}, {pipeline_mode = #tpu.pipeline_mode<synchronous>, transform_indices = @transform_4, window_bounds = array<i64: 4, 1>}, {transform_indices = @transform_5, window_bounds = array<i64: 1, 4, 256>}]} {
    %c0 = arith.constant 0 : index
    %c0_0 = arith.constant 0 : index
    %c0_1 = arith.constant 0 : index
    %0 = vector.load %arg1[%c0, %c0_0, %c0_1] : memref<1x4x256xf32, #tpu.memory_space<vmem>>, vector<1x4x256xf32>
    %1 = vector.shape_cast %0 : vector<1x4x256xf32> to vector<4x256xf32>
    %cst = arith.constant dense<0.000000e+00> : vector<4xf32>
    %2 = vector.multi_reduction <add>, %1, %cst [1] : vector<4x256xf32> to vector<4xf32>
    %3 = vector.shape_cast %2 : vector<4xf32> to vector<4x1xf32>
    %cst_2 = arith.constant 3.906250e-03 : f32
    %4 = vector.broadcast %cst_2 : f32 to vector<4x1xf32>
    %5 = arith.mulf %3, %4 : vector<4x1xf32>
    %6 = vector.broadcast %5 : vector<4x1xf32> to vector<4x256xf32>
    %7 = arith.subf %1, %6 : vector<4x256xf32>
    %8 = arith.mulf %7, %7 : vector<4x256xf32>
    %cst_3 = arith.constant dense<0.000000e+00> : vector<4xf32>
    %9 = vector.multi_reduction <add>, %8, %cst_3 [1] : vector<4x256xf32> to vector<4xf32>
    %10 = vector.shape_cast %9 : vector<4xf32> to vector<4x1xf32>
    %cst_4 = arith.constant 3.906250e-03 : f32
    %11 = vector.broadcast %cst_4 : f32 to vector<4x1xf32>
    %12 = arith.mulf %10, %11 : vector<4x1xf32>
    %13 = math.sqrt %12 : vector<4x1xf32>
    %14 = arith.addf %13, %5 : vector<4x1xf32>
    %c0_5 = arith.constant 0 : index
    %c0_6 = arith.constant 0 : index
    %15 = vector.load %arg2[%c0_5, %c0_6] : memref<4x2xf32, #tpu.memory_space<vmem>>, vector<4x2xf32>
    %c0_7 = arith.constant 0 : index
    %c0_8 = arith.constant 0 : index
    %16 = vector.load %arg3[%c0_7, %c0_8] : memref<1x2xf32, #tpu.memory_space<vmem>>, vector<1x2xf32>
    %c0_9 = arith.constant 0 : index
    %c0_10 = arith.constant 0 : index
    %17 = vector.load %arg4[%c0_9, %c0_10] : memref<4x2xf32, #tpu.memory_space<vmem>>, vector<4x2xf32>
    %c0_11 = arith.constant 0 : index
    %c0_12 = arith.constant 0 : index
    %18 = vector.load %arg5[%c0_11, %c0_12] : memref<4x1xf32, #tpu.memory_space<vmem>>, vector<4x1xf32>
    %19 = vector.broadcast %14 : vector<4x1xf32> to vector<4x2xf32>
    %20 = arith.mulf %15, %19 : vector<4x2xf32>
    %cst_13 = arith.constant dense<0.000000e+00> : vector<2xf32>
    %21 = vector.multi_reduction <add>, %20, %cst_13 [0] : vector<4x2xf32> to vector<2xf32>
    %22 = vector.shape_cast %21 : vector<2xf32> to vector<1x2xf32>
    %23 = arith.addf %22, %16 : vector<1x2xf32>
    %cst_14 = arith.constant 0.000000e+00 : f32
    %24 = vector.broadcast %cst_14 : f32 to vector<1x2xf32>
    %25 = arith.maximumf %23, %24 : vector<1x2xf32>
    %26 = vector.broadcast %25 : vector<1x2xf32> to vector<4x2xf32>
    %27 = arith.mulf %17, %26 : vector<4x2xf32>
    %cst_15 = arith.constant dense<0.000000e+00> : vector<4xf32>
    %28 = vector.multi_reduction <add>, %27, %cst_15 [1] : vector<4x2xf32> to vector<4xf32>
    %29 = vector.shape_cast %28 : vector<4xf32> to vector<4x1xf32>
    %30 = arith.addf %29, %18 : vector<4x1xf32>
    %31 = arith.negf %30 : vector<4x1xf32>
    %32 = math.exp %31 : vector<4x1xf32>
    %cst_16 = arith.constant 1.000000e+00 : f32
    %33 = vector.broadcast %cst_16 : f32 to vector<4x1xf32>
    %34 = arith.addf %33, %32 : vector<4x1xf32>
    %35 = arith.divf %33, %34 : vector<4x1xf32>
    %36 = vector.broadcast %35 : vector<4x1xf32> to vector<4x256xf32>
    %37 = arith.mulf %1, %36 : vector<4x256xf32>
    %c0_17 = arith.constant 0 : index
    %c0_18 = arith.constant 0 : index
    %c0_19 = arith.constant 0 : index
    %38 = vector.load %arg6[%c0_17, %c0_18, %c0_19] : memref<1x4x256xf32, #tpu.memory_space<vmem>>, vector<1x4x256xf32>
    %39 = vector.shape_cast %38 : vector<1x4x256xf32> to vector<4x256xf32>
    %40 = vector.shape_cast %37 : vector<4x256xf32> to vector<1x4x256xf32>
    tpu.vector_store %arg6[%c0_17, %c0_18, %c0_19], %40 {strides = array<i32>} : memref<1x4x256xf32, #tpu.memory_space<vmem>>, vector<1x4x256xf32>,
    return
  }
  func.func @transform_0(%arg0: i32) -> (i32, i32, i32) {
    %c0_i32 = arith.constant 0 : i32
    %c0_i32_0 = arith.constant 0 : i32
    %c0_i32_1 = arith.constant 0 : i32
    return %arg0, %c0_i32, %c0_i32_0 : i32, i32, i32
  }
  func.func @transform_1(%arg0: i32) -> (i32, i32) {
    %c0_i32 = arith.constant 0 : i32
    %c0_i32_0 = arith.constant 0 : i32
    %c0_i32_1 = arith.constant 0 : i32
    return %c0_i32, %c0_i32_0 : i32, i32
  }
  func.func @transform_2(%arg0: i32) -> (i32, i32) {
    %c0_i32 = arith.constant 0 : i32
    %c0_i32_0 = arith.constant 0 : i32
    %c0_i32_1 = arith.constant 0 : i32
    return %c0_i32, %c0_i32_0 : i32, i32
  }
  func.func @transform_3(%arg0: i32) -> (i32, i32) {
    %c0_i32 = arith.constant 0 : i32
    %c0_i32_0 = arith.constant 0 : i32
    %c0_i32_1 = arith.constant 0 : i32
    return %c0_i32, %c0_i32_0 : i32, i32
  }
  func.func @transform_4(%arg0: i32) -> (i32, i32) {
    %c0_i32 = arith.constant 0 : i32
    %c0_i32_0 = arith.constant 0 : i32
    %c0_i32_1 = arith.constant 0 : i32
    return %c0_i32, %c0_i32_0 : i32, i32
  }
  func.func @transform_5(%arg0: i32) -> (i32, i32, i32) {
    %c0_i32 = arith.constant 0 : i32
    %c0_i32_0 = arith.constant 0 : i32
    %c0_i32_1 = arith.constant 0 : i32
    return %arg0, %c0_i32, %c0_i32_0 : i32, i32, i32
  }
}

</mosaic_0001>

<llo_original>
// kernel: tpu_custom_call.1
$region0: #{tpu_custom_call.1}
  #allocation0 [shape = 'u32[]', space=smem, size = 0x4, offset = 0x4, fixed_abs, tag = 'smem constant byte address 0x4 - core index']
  #allocation1 [shape = 'u32[72,128]{1,0:T(1,128)}', space=vmem, size = 0x9000, scoped, tag = 'internal scratch']
  %s0 = inlined_call_operand.hbm [shape: f32[2,4,256], index: 0, kind: input, shape index: {}]
  %s1 = inlined_call_operand.vmem [shape: f32[4,2], index: 1, kind: input, shape index: {}]
  %s2 = inlined_call_operand.vmem [shape: f32[1,2], index: 2, kind: input, shape index: {}]
  %s3 = inlined_call_operand.vmem [shape: f32[4,2], index: 3, kind: input, shape index: {}]
  %s4 = inlined_call_operand.vmem [shape: f32[4,1], index: 4, kind: input, shape index: {}]
  %s5 = inlined_call_operand.hbm [shape: f32[2,4,256], index: 5, kind: output, shape index: {}]
  %s6 = sld [smem:[#allocation0]]
  $region57: #{tpu_custom_call.1} parent=0
    _
  %s8 = ssub.s32 1, %s6
  %s9 = scalar_select 0, %s8, %s6
  $region1: #{tpu_custom_call.1} parent=0
    #allocation2 [shape = 'u8[8192]{0}', space=vmem, size = 0x2000, scoped, tag = 'input window, operand 0']
    #allocation3 [shape = 's32[2]{0}', space=sflag, size = 0x8, scoped, tag = 'scoped memory for tpu_custom_call.1']
    #allocation4 [shape = 's32[2]{0}', space=sflag, size = 0x8, scoped, tag = 'scoped memory for tpu_custom_call.1']
    #allocation5 [shape = 'u8[8192]{0}', space=vmem, size = 0x2000, scoped, tag = 'output window, operand 0']
    %10 = vsyncpa [#allocation3], 0
    %s11 = scalar_lea.sflag [#allocation3], 1
    %12 = vsyncpa %s11, 0
    %13 = vsyncpa [#allocation4], 0
    %s14 = scalar_lea.sflag [#allocation4], 1
    %15 = vsyncpa %s14, 0
    loop: start=0, step=1, limit=4
    $region2: #{tpu_custom_call.1} parent=1 // loop_pre_header
      _
    $region3: #{tpu_custom_call.1} parent=1 // loop_header
      %s17 = sphi 0, %s21
      %p18 = scmp.ge.s32.totalorder %s17, 4
      %s27 = sphi 0, %s29
      %s30 = sphi 0, %s27
      %s31 = sphi 0, %s30
      %s47 = sphi 0, %s31
      %s51 = sphi 0, %s51
      %s53 = sphi 0, %s51
      %s54 = sphi 0, %s53
      %s68 = sphi 0, %s54
      %s72 = sphi 0, %s72
      %s74 = sphi 0, %s72
      %s75 = sphi 0, %s74
      %s89 = sphi 0, %s75
      %s93 = sphi 0, %s93
      %s95 = sphi 0, %s93
      %s96 = sphi 0, %s95
      %s110 = sphi 0, %s96
      %s114 = sphi 0, %s114
      %s116 = sphi 0, %s114
      %s117 = sphi 0, %s116
      %s131 = sphi 0, %s117
      %s137 = sphi 0, %s139
      %s140 = sphi 0, %s137
      %s141 = sphi 0, %s140
      %s157 = sphi 0, %s141
    $region4: #{tpu_custom_call.1} parent=1 // loop_header_branch
      %20 = sbr.rel (%p18) target = $region8
    $region5: #{tpu_custom_call.1} parent=1 // loop_body
      %s22 = ssub.s32 %s17, 1
      %s23 = ssub.s32 %s17, 2
      %s24 = sadd.s32 %s17, 1
      %s25 = ssub.s32 %s17, %s24
      %p26 = scmp.eq.s32.totalorder %s25, 0
      %s28 = sadd.s32 %s27, 1
      %s29 = scalar_select %p26, %s27, %s28
      %p32 = pneg %p26
      %p33 = scmp.eq.s32.totalorder %s17, 1
      %p34 = por %p32, %p33
      %p35 = scmp.ne.s32.totalorder %s27, %s30
      %p36 = scmp.eq.s32.totalorder %s17, 0
      %p37 = por %p35, %p36
      %p38 = scmp.ne.s32.totalorder %s27, %s30
      %p39 = scmp.eq.s32.totalorder %s22, 1
      %p40 = por %p38, %p39
      %p41 = scmp.ne.s32.totalorder %s30, %s31
      %p42 = scmp.eq.s32.totalorder %s22, 0
      %p43 = por %p41, %p42
      %p44 = scmp.ne.s32.totalorder %s30, %s31
      %p45 = scmp.eq.s32.totalorder %s23, 1
      %p46 = por %p44, %p45
      %p48 = scmp.ne.s32.totalorder %s31, %s47
      %p49 = scmp.eq.s32.totalorder %s23, 0
      %p50 = por %p48, %p49
      %s52 = sadd.s32 %s51, 1
      %p55 = scmp.eq.s32.totalorder %s17, 1
      %p56 = scmp.ne.s32.totalorder %s51, %s53
      %p57 = scmp.eq.s32.totalorder %s17, 0
      %p58 = por %p56, %p57
      %p59 = scmp.ne.s32.totalorder %s51, %s53
      %p60 = scmp.eq.s32.totalorder %s22, 1
      %p61 = por %p59, %p60
      %p62 = scmp.ne.s32.totalorder %s53, %s54
      %p63 = scmp.eq.s32.totalorder %s22, 0
      %p64 = por %p62, %p63
      %p65 = scmp.ne.s32.totalorder %s53, %s54
      %p66 = scmp.eq.s32.totalorder %s23, 1
      %p67 = por %p65, %p66
      %p69 = scmp.ne.s32.totalorder %s54, %s68
      %p70 = scmp.eq.s32.totalorder %s23, 0
      %p71 = por %p69, %p70
      %s73 = sadd.s32 %s72, 1
      %p76 = scmp.eq.s32.totalorder %s17, 1
      %p77 = scmp.ne.s32.totalorder %s72, %s74
      %p78 = scmp.eq.s32.totalorder %s17, 0
      %p79 = por %p77, %p78
      %p80 = scmp.ne.s32.totalorder %s72, %s74
      %p81 = scmp.eq.s32.totalorder %s22, 1
      %p82 = por %p80, %p81
      %p83 = scmp.ne.s32.totalorder %s74, %s75
      %p84 = scmp.eq.s32.totalorder %s22, 0
      %p85 = por %p83, %p84
      %p86 = scmp.ne.s32.totalorder %s74, %s75
      %p87 = scmp.eq.s32.totalorder %s23, 1
      %p88 = por %p86, %p87
      %p90 = scmp.ne.s32.totalorder %s75, %s89
      %p91 = scmp.eq.s32.totalorder %s23, 0
      %p92 = por %p90, %p91
      %s94 = sadd.s32 %s93, 1
      %p97 = scmp.eq.s32.totalorder %s17, 1
      %p98 = scmp.ne.s32.totalorder %s93, %s95
      %p99 = scmp.eq.s32.totalorder %s17, 0
      %p100 = por %p98, %p99
      %p101 = scmp.ne.s32.totalorder %s93, %s95
      %p102 = scmp.eq.s32.totalorder %s22, 1
      %p103 = por %p101, %p102
      %p104 = scmp.ne.s32.totalorder %s95, %s96
      %p105 = scmp.eq.s32.totalorder %s22, 0
      %p106 = por %p104, %p105
      %p107 = scmp.ne.s32.totalorder %s95, %s96
      %p108 = scmp.eq.s32.totalorder %s23, 1
      %p109 = por %p107, %p108
      %p111 = scmp.ne.s32.totalorder %s96, %s110
      %p112 = scmp.eq.s32.totalorder %s23, 0
      %p113 = por %p111, %p112
      %s115 = sadd.s32 %s114, 1
      %p118 = scmp.eq.s32.totalorder %s17, 1
      %p119 = scmp.ne.s32.totalorder %s114, %s116
      %p120 = scmp.eq.s32.totalorder %s17, 0
      %p121 = por %p119, %p120
      %p122 = scmp.ne.s32.totalorder %s114, %s116
      %p123 = scmp.eq.s32.totalorder %s22, 1
      %p124 = por %p122, %p123
      %p125 = scmp.ne.s32.totalorder %s116, %s117
      %p126 = scmp.eq.s32.totalorder %s22, 0
      %p127 = por %p125, %p126
      %p128 = scmp.ne.s32.totalorder %s116, %s117
      %p129 = scmp.eq.s32.totalorder %s23, 1
      %p130 = por %p128, %p129
      %p132 = scmp.ne.s32.totalorder %s117, %s131
      %p133 = scmp.eq.s32.totalorder %s23, 0
      %p134 = por %p132, %p133
      %s135 = ssub.s32 %s17, %s24
      %p136 = scmp.eq.s32.totalorder %s135, 0
      %s138 = sadd.s32 %s137, 1
      %s139 = scalar_select %p136, %s137, %s138
      %p142 = pneg %p136
      %p143 = scmp.eq.s32.totalorder %s17, 1
      %p144 = por %p142, %p143
      %p145 = scmp.ne.s32.totalorder %s137, %s140
      %p146 = scmp.eq.s32.totalorder %s17, 0
      %p147 = por %p145, %p146
      %p148 = scmp.ne.s32.totalorder %s137, %s140
      %p149 = scmp.eq.s32.totalorder %s22, 1
      %p150 = por %p148, %p149
      %p151 = scmp.ne.s32.totalorder %s140, %s141
      %p152 = scmp.eq.s32.totalorder %s22, 0
      %p153 = por %p151, %p152
      %p154 = scmp.ne.s32.totalorder %s140, %s141
      %p155 = scmp.eq.s32.totalorder %s23, 1
      %p156 = por %p154, %p155
      %p158 = scmp.ne.s32.totalorder %s141, %s157
      %p159 = scmp.eq.s32.totalorder %s23, 0
      %p160 = por %p158, %p159
      %p161 = scmp.le.s32.totalorder 1, %s17
      %p162 = scmp.lt.s32.totalorder %s17, 3
      %p163 = pnand %p161, %p162
      %p164 = pneg %p163
      // Predicated region
      $region9: #{tpu_custom_call.1} parent=5 // pred_check
        _
      $region10: #{tpu_custom_call.1} parent=5 // pred_check_branch
        %166 = sbr.rel (%p163) target = $region12
      $region11: #{tpu_custom_call.1} parent=5 // pred_region
        %s167 = ssub.s32 %s17, 1
        // Predicated region
        $region13: #{tpu_custom_call.1} parent=11 // pred_check
          %p168 = pneg %p64
        $region14: #{tpu_custom_call.1} parent=11 // pred_check_branch
          %170 = sbr.rel (%p168) target = $region16
        $region15: #{tpu_custom_call.1} parent=11 // pred_region
          _
        $region16: #{tpu_custom_call.1} parent=11 // pred_fallthru
          _
        // Predicated region
        $region17: #{tpu_custom_call.1} parent=11 // pred_check
          %p171 = pneg %p85
        $region18: #{tpu_custom_call.1} parent=11 // pred_check_branch
          %173 = sbr.rel (%p171) target = $region20
        $region19: #{tpu_custom_call.1} parent=11 // pred_region
          _
        $region20: #{tpu_custom_call.1} parent=11 // pred_fallthru
          _
        // Predicated region
        $region21: #{tpu_custom_call.1} parent=11 // pred_check
          %p174 = pneg %p106
        $region22: #{tpu_custom_call.1} parent=11 // pred_check_branch
          %176 = sbr.rel (%p174) target = $region24
        $region23: #{tpu_custom_call.1} parent=11 // pred_region
          _
        $region24: #{tpu_custom_call.1} parent=11 // pred_fallthru
          _
        // Predicated region
        $region25: #{tpu_custom_call.1} parent=11 // pred_check
          %p177 = pneg %p127
        $region26: #{tpu_custom_call.1} parent=11 // pred_check_branch
          %179 = sbr.rel (%p177) target = $region28
        $region27: #{tpu_custom_call.1} parent=11 // pred_region
          _
        $region28: #{tpu_custom_call.1} parent=11 // pred_fallthru
          _
      $region12: #{tpu_custom_call.1} parent=5 // pred_fallthru
        _
      %p180 = scmp.lt.s32.totalorder %s17, 2
      // Predicated region
      $region29: #{tpu_custom_call.1} parent=5 // pred_check
        %p181 = pneg %p180
      $region30: #{tpu_custom_call.1} parent=5 // pred_check_branch
        %183 = sbr.rel (%p181) target = $region32
      $region31: #{tpu_custom_call.1} parent=5 // pred_region
        // Predicated region
        $region33: #{tpu_custom_call.1} parent=31 // pred_check
          %p184 = pneg %p37
        $region34: #{tpu_custom_call.1} parent=31 // pred_check_branch
          %186 = sbr.rel (%p184) target = $region36
        $region35: #{tpu_custom_call.1} parent=31 // pred_region
          %s187 = sand.u32 %s27, 1
          %s188 = scalar_lea.sflag [#allocation3], %s187
          %s189 = sand.u32 %s27, 1
          %s190 = smul.addr %s189, 8
          %s191 = scalar_lea.vmem [#allocation2], %s190
          %193 = vsyncadd %s188, 0
          %s194 = smul.addr %s17, 2
          %s195 = smul.addr %s194, 4
          %s196 = scalar_lea.hbm %s0, %s195
          %s198 = sshll.u32 %s196, 4
          %s199 = int_to_ptr.hbm [resolvable:$true] %s198
          %s200 = sshll.u32 %s191, 4
          %s201 = int_to_ptr.vmem [resolvable:$true] %s200
          %203 = dma.hbm_to_vmem [thread:$0]  %s199, 128, %s201, %s188
        $region36: #{tpu_custom_call.1} parent=31 // pred_fallthru
          _
      $region32: #{tpu_custom_call.1} parent=5 // pred_fallthru
        _
      %p204 = scmp.le.s32.totalorder 1, %s17
      %p205 = scmp.lt.s32.totalorder %s17, 3
      %p206 = pnand %p204, %p205
      %p207 = pneg %p206
      // Predicated region
      $region37: #{tpu_custom_call.1} parent=5 // pred_check
        _
      $region38: #{tpu_custom_call.1} parent=5 // pred_check_branch
        %209 = sbr.rel (%p206) target = $region40
      $region39: #{tpu_custom_call.1} parent=5 // pred_region
        %s210 = ssub.s32 %s17, 1
        %s211 = sand.u32 %s30, 1
        %s212 = scalar_lea.sflag [#allocation3], %s211
        %s213 = sand.u32 %s30, 1
        %s214 = smul.addr %s213, 8
        %s215 = scalar_lea.vmem [#allocation2], %s214
        // Predicated region
        $region41: #{tpu_custom_call.1} parent=39 // pred_check
          %p216 = pneg %p43
        $region42: #{tpu_custom_call.1} parent=39 // pred_check_branch
          %218 = sbr.rel (%p216) target = $region44
        $region43: #{tpu_custom_call.1} parent=39 // pred_region
          %220 = dma.done %s212, 128
        $region44: #{tpu_custom_call.1} parent=39 // pred_fallthru
          _
        %s221 = sand.u32 %s30, 1
        %s222 = scalar_lea.sflag [#allocation3], %s221
        %s223 = sand.u32 %s30, 1
        %s224 = smul.addr %s223, 8
        %s225 = scalar_lea.vmem [#allocation2], %s224
        %p226 = pneg %p43
        %p227 = pneg %p40
        %p228 = pneg %p64
        %p229 = pneg %p61
        %p230 = pneg %p85
        %p231 = pneg %p82
        %p232 = pneg %p106
        %p233 = pneg %p103
        %p234 = pneg %p127
        %p235 = pneg %p124
        %p236 = pneg %p153
        %p237 = pneg %p150
        %s238 = sand.u32 %s140, 1
        %s239 = scalar_lea.sflag [#allocation4], %s238
        %s240 = sand.u32 %s140, 1
        %s241 = smul.addr %s240, 8
        %s242 = scalar_lea.vmem [#allocation5], %s241
        %v243 = vld [vmem:[%s215] sm:$0xff]
        %245 = vst [vmem:[#allocation1] ss:$2 sm:$0xff] %v243
        %v246 = vld.sshfl [vmem:[#allocation1] sm:$0xff pattern:$0x75316420]
        %v247 = vld.sshfl [vmem:[#allocation1 + $0x8] sm:$0xff pattern:$0x75316420]
        %vm250 = vcmask 1043456
        %v251 = vsel %vm250, %v246, 0.0
        %v252 = vsel %vm250, %v247, 0.0
        %v253 = vadd.f32 %v251, %v252
        %254 = vadd.xlane.f32.xlu0 %v253
        %v255 = vpop.xlane.xlu0 %254
        %v256 = vmul.f32 %v255, 0.00390625
        %v259 = vunpack.c.l.s4 839922192
        %v260 = vunpack.c.0.s8 %v259
        %v261 = vperm.slane %v256, %v260
        %v263 = vsub.f32 %v243, %v261
        %v264 = vmul.f32 %v263, %v263
        %266 = vst [vmem:[#allocation1] ss:$2 sm:$0xff] %v264
        %v267 = vld.sshfl [vmem:[#allocation1] sm:$0xff pattern:$0x75316420]
        %v268 = vld.sshfl [vmem:[#allocation1 + $0x8] sm:$0xff pattern:$0x75316420]
        %v271 = vsel %vm250, %v267, 0.0
        %v272 = vsel %vm250, %v268, 0.0
        %v273 = vadd.f32 %v271, %v272
        %274 = vadd.xlane.f32.xlu0 %v273
        %v275 = vpop.xlane.xlu0 %274
        %v276 = vmul.f32 %v275, 0.00390625
        %v277 = vrsqrt.pop %v276
        %v278 = vmul.f32 %v277, %v276
        %v279 = vmul.f32 %v278, %v277
        %v280 = vmul.f32 0.5, %v279
        %v281 = vsub.f32 1.5, %v280
        %v282 = vmul.f32 %v277, %v281
        %v283 = vmul.f32 %v276, %v282
        %vm284 = vcmp.eq.f32.partialorder %v276, inf
        %v285 = vsel %vm284, %v276, %v283
        %vm286 = vcmp.eq.f32.partialorder %v276, 0.0
        %v287 = vand.u32 %v276, 2147483648
        %v288 = vsel %vm286, %v287, %v285
        %v289 = vadd.f32 %v288, %v256
        %v290 = vld [vmem:[%s1] sm:$0xf]
        %v291 = vld [vmem:[%s2] sm:$0x1]
        %v292 = vld [vmem:[%s3] sm:$0xf]
        %v293 = vld [vmem:[%s4] sm:$0xf]
        %v294 = vmul.f32 %v290, %v289
        %vm295 = vcmask 11264
        %v296 = vsel %vm295, %v294, 0.0
        %v297 = vrot.slane %v296, 4
        %v298 = vadd.f32 %v296, %v297
        %v299 = vrot.slane %v298, 2
        %v300 = vadd.f32 %v298, %v299
        %v301 = vrot.slane %v300, 1
        %v302 = vadd.f32 %v300, %v301
        %v303 = vadd.f32 %v302, %v291
        %v304 = vmax.f32 %v303, 0.0
        %v305 = vperm.slane %v304, 0
        %v306 = vmul.f32 %v292, %v305
        %v307 = vsel %vm295, %v306, 0.0
        %308 = vadd.xlane.f32.xlu0 %v307
        %v309 = vpop.xlane.xlu0 %308
        %v310 = vadd.f32 %v309, %v293
        %v311 = vxor.u32 %v310, 2147483648
        %v312 = vmul.f32 %v311, 1.442695
        %v313 = vpow.pop %v312
        %v314 = vadd.f32 %v313, 1.0
        %v315 = vrcp.pop %v314
        %v316 = vmul.f32 %v314, %v315
        %v317 = vsub.f32 1.0, %v316
        %v318 = vmul.f32 %v315, %v317
        %v319 = vadd.f32 %v315, %v318
        %vm320 = vweird.f32 %v314
        %vm321 = vweird.f32 %v315
        %vm322 = vmor %vm320, %vm321
        %v323 = vsel %vm322, %v315, %v319
        %v324 = vand.u32 2147483647, %v314
        %vm325 = vcmp.eq.f32.partialorder %v324, 8.507059e+37
        %v326 = vand.u32 %v314, 2147483648
        %v327 = vor.u32 1.1754944e-38, %v326
        %v328 = vsel %vm325, %v327, %v323
        %v329 = vmul.f32 1.0, %v328
        %331 = vset.pattern.permute.xlu0 0
        %332 = vperm.xlu0 %331, %v329
        %v333 = vpop.permute.xlu0 %332
        %v335 = vunpack.c.l.s4 839922192
        %v336 = vunpack.c.0.s8 %v335
        %v337 = vperm.slane %v333, %v336
        %v339 = vmul.f32 %v243, %v337
        %340 = vst [vmem:[%s242] sm:$0xff] %v339
        %s341 = sand.u32 %s140, 1
        %s342 = scalar_lea.sflag [#allocation4], %s341
        %s343 = sand.u32 %s140, 1
        %s344 = smul.addr %s343, 8
        %s345 = scalar_lea.vmem [#allocation5], %s344
        // Predicated region
        $region45: #{tpu_custom_call.1} parent=39 // pred_check
          %p346 = pneg %p150
        $region46: #{tpu_custom_call.1} parent=39 // pred_check_branch
          %348 = sbr.rel (%p346) target = $region48
        $region47: #{tpu_custom_call.1} parent=39 // pred_region
          %350 = vsyncadd %s342, 0
          %s351 = smul.addr %s22, 2
          %s352 = smul.addr %s351, 4
          %s353 = scalar_lea.hbm %s5, %s352
          %s355 = sshll.u32 %s345, 4
          %s356 = int_to_ptr.vmem [resolvable:$true] %s355
          %s357 = sshll.u32 %s353, 4
          %s358 = int_to_ptr.hbm [resolvable:$true] %s357
          %360 = dma.vmem_to_hbm [thread:$0]  %s356, 128, %s358, %s342
        $region48: #{tpu_custom_call.1} parent=39 // pred_fallthru
          _
      $region40: #{tpu_custom_call.1} parent=5 // pred_fallthru
        _
      %p361 = scmp.le.s32.totalorder 2, %s17
      // Predicated region
      $region49: #{tpu_custom_call.1} parent=5 // pred_check
        %p362 = pneg %p361
      $region50: #{tpu_custom_call.1} parent=5 // pred_check_branch
        %364 = sbr.rel (%p362) target = $region52
      $region51: #{tpu_custom_call.1} parent=5 // pred_region
        %s365 = ssub.s32 %s17, 2
        // Predicated region
        $region53: #{tpu_custom_call.1} parent=51 // pred_check
          %p366 = pneg %p156
        $region54: #{tpu_custom_call.1} parent=51 // pred_check_branch
          %368 = sbr.rel (%p366) target = $region56
        $region55: #{tpu_custom_call.1} parent=51 // pred_region
          %s369 = sand.u32 %s141, 1
          %s370 = scalar_lea.sflag [#allocation4], %s369
          %s371 = sand.u32 %s141, 1
          %s372 = smul.addr %s371, 8
          %s373 = scalar_lea.vmem [#allocation5], %s372
          %375 = dma.done %s370, 128
        $region56: #{tpu_custom_call.1} parent=51 // pred_fallthru
          _
      $region52: #{tpu_custom_call.1} parent=5 // pred_fallthru
        _
    $region6: #{tpu_custom_call.1} parent=1 // loop_footer
      %s21 = sadd.s32 1, %s17
    $region7: #{tpu_custom_call.1} parent=1 // loop_footer_branch
      %16 = sbr.rel target = $region3
    $region8: #{tpu_custom_call.1} parent=1 // loop_exit
      _
    %376 = vsyncpa [#allocation3], 1
    %s377 = scalar_lea.sflag [#allocation3], 1
    %378 = vsyncpa %s377, 1
    %379 = vsyncpa [#allocation4], 1
    %s380 = scalar_lea.sflag [#allocation4], 1
    %381 = vsyncpa %s380, 1

</llo_original>
